<compile_context>
chip_gen: v5e
topology: v5e:2x2
jax: 0.10.0
libtpu: 0.0.40
codegen_flags: <defaults>
</compile_context>

<pallas_src>
import jax
import jax.numpy as jnp
from jax.experimental import pallas as pl
from jax.experimental.pallas import tpu as pltpu

FEAT_DIM = 1000      # timm backbone classifier output size
DIMRED_DIM = 64      # nn.Linear(1000, 64)
NUM_CLASSES = 7      # nn.Linear(64, 7)
LANE = 128           # TPU lane width; output padded to this


def _round_up(n, m):
    return ((n + m - 1) // m) * m


def classifier_kernel(x_ref, w_ref, b_ref, o_ref):
    # x_ref: (tile_B, C, HW) f32   w_ref: (C, 128) f32   b_ref: (1, 128) f32
    feat = jnp.mean(x_ref[...], axis=-1)                    # GAP -> (tile_B, C)
    acc = jnp.dot(feat, w_ref[...], preferred_element_type=jnp.float32)
    o_ref[...] = acc + b_ref[...]                            # (tile_B, 128)


def init_params(key, in_channels=3):
    """Unfused params, stored (in, out): x @ W + b == PyTorch x @ W.T + b."""
    k = jax.random.split(key, 6)
    s = 0.02
    wb = jax.random.normal(k[0], (in_channels, FEAT_DIM), jnp.float32) * s
    bb = jax.random.normal(k[1], (1, FEAT_DIM), jnp.float32) * s
    w1 = jax.random.normal(k[2], (FEAT_DIM, DIMRED_DIM), jnp.float32) * s
    b1 = jax.random.normal(k[3], (1, DIMRED_DIM), jnp.float32) * s
    w2 = jax.random.normal(k[4], (DIMRED_DIM, NUM_CLASSES), jnp.float32) * s
    b2 = jax.random.normal(k[5], (1, NUM_CLASSES), jnp.float32) * s
    return (wb, bb, w1, b1, w2, b2)


def fold_params(params):
    """One-time prep: collapse the purely linear chain into one (C,128) GEMV."""
    wb, bb, w1, b1, w2, b2 = params
    # Pad the 7-class head to 128 lanes (zero columns -> zero logits past :7).
    w2p = jnp.zeros((DIMRED_DIM, LANE), jnp.float32).at[:, :NUM_CLASSES].set(w2)
    b2p = jnp.zeros((1, LANE), jnp.float32).at[:, :NUM_CLASSES].set(b2)
    # Fold dimred + head: exact for CustomModel (no nonlinearity between them).
    w12 = w1 @ w2p                        # (1000, 128)
    b12 = b1 @ w2p + b2p                  # (1, 128)
    # TODO(synk): the real timm backbone (arbitrary architecture selected at
    # runtime via model_name) is NOT linear and cannot be folded; this fold is
    # exact only for the GAP+Linear stand-in backbone.
    w_all = wb @ w12                      # (C, 128)  -- GAP applied in-kernel
    b_all = bb @ w12 + b12                # (1, 128)
    return w_all.astype(jnp.float32), b_all.astype(jnp.float32)


def custom_model_forward(x, folded):
    """x: NCHW float32 (B, C, H, W) -> logits (B, 7)."""
    B, C, H, W = x.shape
    w_all, b_all = folded
    assert w_all.shape == (C, LANE), (w_all.shape, C)
    HW = H * W
    x3 = x.reshape(B, C, HW)              # contiguous, free reshape

    # Sublane-aligned batch tile, sized against a conservative per-buffer VMEM
    # budget (double-buffered by the pipeline; safe for v7x's 64 MiB VMEM).
    bytes_per_row = C * HW * 4
    budget = 8 * 1024 * 1024
    tile_b = max(8, min(128, (budget // bytes_per_row) // 8 * 8))
    tile_b = min(tile_b, _round_up(B, 8))
    b_pad = _round_up(B, tile_b)
    if b_pad != B:
        x3 = jnp.pad(x3, ((0, b_pad - B), (0, 0), (0, 0)))

    out_pad = pl.pallas_call(
        classifier_kernel,
        out_shape=jax.ShapeDtypeStruct((b_pad, LANE), jnp.float32),
        grid=(b_pad // tile_b,),
        in_specs=[
            pl.BlockSpec((tile_b, C, HW), lambda i: (i, 0, 0)),   # streamed x
            pl.BlockSpec((C, LANE), lambda i: (0, 0)),            # resident W
            pl.BlockSpec((1, LANE), lambda i: (0, 0)),            # resident b
        ],
        out_specs=pl.BlockSpec((tile_b, LANE), lambda i: (i, 0)),
        compiler_params=pltpu.CompilerParams(
            dimension_semantics=("parallel",)),
    )(x3, w_all, b_all)
    return out_pad[:B, :NUM_CLASSES]


if __name__ == "__main__":
    key = jax.random.PRNGKey(0)
    kx, kp = jax.random.split(key)
    # small image-like input consistent with a timm backbone: NCHW, 3 channels
    B, C, H, W = 2, 3, 16, 16
    x = jax.random.normal(kx, (B, C, H, W), jnp.float32)
    params = init_params(kp, in_channels=C)
    folded = fold_params(params)

    out = custom_model_forward(x, folded)
    out = jax.block_until_ready(out)
    assert out.shape == (B, NUM_CLASSES), out.shape

    # Reference: unfused stand-in forward in plain f32 JAX.
    wb, bb, w1, b1, w2, b2 = params
    feat = jnp.mean(x.reshape(B, C, H * W), axis=-1)
    ref = ((feat @ wb + bb) @ w1 + b1) @ w2 + b2
    assert jnp.allclose(out, ref, atol=1e-3, rtol=1e-3), (
        jnp.max(jnp.abs(out - ref)))

    print("KERNEL_OK")
</pallas_src>

<mosaic_0001>
module attributes {stable_mosaic.version = 11 : i64} {
  func.func @classifier_kernel(%arg0: i32, %arg1: memref<8x3x256xf32, #tpu.memory_space<vmem>>, %arg2: memref<3x128xf32, #tpu.memory_space<vmem>>, %arg3: memref<1x128xf32, #tpu.memory_space<vmem>>, %arg4: memref<8x128xf32, #tpu.memory_space<vmem>>) attributes {dimension_semantics = [#tpu.dimension_semantics<parallel>], iteration_bounds = array<i64: 1>, scalar_prefetch = 0 : i64, scratch_operands = 0 : i64, tpu.core_type = #tpu.core_type<tc>, window_params = [{transform_indices = @transform_0, window_bounds = array<i64: 8, 3, 256>}, {pipeline_mode = #tpu.pipeline_mode<synchronous>, transform_indices = @transform_1, window_bounds = array<i64: 3, 128>}, {pipeline_mode = #tpu.pipeline_mode<synchronous>, transform_indices = @transform_2, window_bounds = array<i64: 1, 128>}, {transform_indices = @transform_3, window_bounds = array<i64: 8, 128>}]} {
    %c0 = arith.constant 0 : index
    %c0_0 = arith.constant 0 : index
    %c0_1 = arith.constant 0 : index
    %0 = vector.load %arg1[%c0, %c0_0, %c0_1] : memref<8x3x256xf32, #tpu.memory_space<vmem>>, vector<8x3x256xf32>
    %cst = arith.constant dense<0.000000e+00> : vector<8x3xf32>
    %1 = vector.multi_reduction <add>, %0, %cst [2] : vector<8x3x256xf32> to vector<8x3xf32>
    %cst_2 = arith.constant 2.560000e+02 : f32
    %2 = vector.broadcast %cst_2 : f32 to vector<8x3xf32>
    %3 = arith.divf %1, %2 : vector<8x3xf32>
    %c0_3 = arith.constant 0 : index
    %c0_4 = arith.constant 0 : index
    %4 = vector.load %arg2[%c0_3, %c0_4] : memref<3x128xf32, #tpu.memory_space<vmem>>, vector<3x128xf32>
    %cst_5 = arith.constant dense<0.000000e+00> : vector<8x128xf32>
    %5 = tpu.matmul %3, %4, %cst_5 {dimension_numbers = #tpu.dot_dimension_numbers<[1], [0], [0], [1], [0, 0, 1, 1], [], []>} : vector<8x3xf32>, vector<3x128xf32>, vector<8x128xf32> -> vector<8x128xf32>
    %c0_6 = arith.constant 0 : index
    %c0_7 = arith.constant 0 : index
    %6 = vector.load %arg3[%c0_6, %c0_7] : memref<1x128xf32, #tpu.memory_space<vmem>>, vector<1x128xf32>
    %7 = vector.broadcast %6 : vector<1x128xf32> to vector<8x128xf32>
    %8 = arith.addf %5, %7 : vector<8x128xf32>
    %c0_8 = arith.constant 0 : index
    %c0_9 = arith.constant 0 : index
    %9 = vector.load %arg4[%c0_8, %c0_9] : memref<8x128xf32, #tpu.memory_space<vmem>>, vector<8x128xf32>
    tpu.vector_store %arg4[%c0_8, %c0_9], %8 {strides = array<i32>} : memref<8x128xf32, #tpu.memory_space<vmem>>, vector<8x128xf32>,
    return
  }
  func.func @transform_0(%arg0: i32) -> (i32, i32, i32) {
    %c0_i32 = arith.constant 0 : i32
    %c0_i32_0 = arith.constant 0 : i32
    %c0_i32_1 = arith.constant 0 : i32
    return %arg0, %c0_i32, %c0_i32_0 : i32, i32, i32
  }
  func.func @transform_1(%arg0: i32) -> (i32, i32) {
    %c0_i32 = arith.constant 0 : i32
    %c0_i32_0 = arith.constant 0 : i32
    %c0_i32_1 = arith.constant 0 : i32
    return %c0_i32, %c0_i32_0 : i32, i32
  }
  func.func @transform_2(%arg0: i32) -> (i32, i32) {
    %c0_i32 = arith.constant 0 : i32
    %c0_i32_0 = arith.constant 0 : i32
    %c0_i32_1 = arith.constant 0 : i32
    return %c0_i32, %c0_i32_0 : i32, i32
  }
  func.func @transform_3(%arg0: i32) -> (i32, i32) {
    %c0_i32 = arith.constant 0 : i32
    %c0_i32_0 = arith.constant 0 : i32
    return %arg0, %c0_i32 : i32, i32
  }
}

</mosaic_0001>

<llo_original>
// kernel: tpu_custom_call.1
$region0: #{tpu_custom_call.1}
  #allocation0 [shape = 'u32[]', space=smem, size = 0x4, offset = 0x4, fixed_abs, tag = 'smem constant byte address 0x4 - core index']
  #allocation1 [shape = 'u32[72,128]{1,0:T(1,128)}', space=vmem, size = 0x9000, scoped, tag = 'internal scratch']
  %s0 = inlined_call_operand.vmem [shape: f32[8,3,256], index: 0, kind: input, shape index: {}]
  %s1 = inlined_call_operand.vmem [shape: f32[3,128], index: 1, kind: input, shape index: {}]
  %s2 = inlined_call_operand.vmem [shape: f32[1,128], index: 2, kind: input, shape index: {}]
  %s3 = inlined_call_operand.hbm [shape: f32[8,128], index: 3, kind: output, shape index: {}]
  %s4 = sld [smem:[#allocation0]]
  $region22: #{tpu_custom_call.1} parent=0
    _
  %s6 = ssub.s32 1, %s4
  %s7 = scalar_select 0, %s6, %s4
  $region1: #{tpu_custom_call.1} parent=0
    #allocation2 [shape = 'u8[4096]{0}', space=vmem, size = 0x1000, scoped, tag = 'output window, operand 0, single buffered']
    #allocation3 [shape = 's32[1]{0}', space=sflag, size = 0x4, scoped, tag = 'scoped memory for tpu_custom_call.1']
    %8 = vsyncpa [#allocation3], 0
    // Predicated region
    $region2: #{tpu_custom_call.1} parent=1 // pred_check
      _
    $region3: #{tpu_custom_call.1} parent=1 // pred_check_branch
      %10 = sbr.rel (0) target = $region5
    $region4: #{tpu_custom_call.1} parent=1 // pred_region
      _
    $region5: #{tpu_custom_call.1} parent=1 // pred_fallthru
      _
    // Predicated region
    $region6: #{tpu_custom_call.1} parent=1 // pred_check
      _
    $region7: #{tpu_custom_call.1} parent=1 // pred_check_branch
      %12 = sbr.rel (0) target = $region9
    $region8: #{tpu_custom_call.1} parent=1 // pred_region
      _
    $region9: #{tpu_custom_call.1} parent=1 // pred_fallthru
      _
    // Predicated region
    $region10: #{tpu_custom_call.1} parent=1 // pred_check
      _
    $region11: #{tpu_custom_call.1} parent=1 // pred_check_branch
      %14 = sbr.rel (0) target = $region13
    $region12: #{tpu_custom_call.1} parent=1 // pred_region
      _
    $region13: #{tpu_custom_call.1} parent=1 // pred_fallthru
      _
    %v15 = vld [vmem:[%s0] sm:$0x77]
    %v16 = vld [vmem:[%s0 + $0x8] sm:$0x77]
    %v17 = vld [vmem:[%s0 + $0x10] sm:$0x77]
    %v18 = vld [vmem:[%s0 + $0x18] sm:$0x77]
    %v19 = vld [vmem:[%s0 + $0x20] sm:$0x77]
    %v20 = vld [vmem:[%s0 + $0x28] sm:$0x77]
    %v21 = vld [vmem:[%s0 + $0x30] sm:$0x77]
    %v22 = vld [vmem:[%s0 + $0x38] sm:$0x77]
    %31 = vst [vmem:[#allocation1] ss:$2 sm:$0xff] %v15
    %v32 = vld.sshfl [vmem:[#allocation1] sm:$0xff pattern:$0x75316420]
    %v33 = vld.sshfl [vmem:[#allocation1 + $0x8] sm:$0xff pattern:$0x75316420]
    %s34 = scalar_lea.vmem [#allocation1], 16
    %35 = vst [vmem:[%s34] ss:$2 sm:$0xff] %v16
    %v36 = vld.sshfl [vmem:[#allocation1 + $0x10] sm:$0xff pattern:$0x75316420]
    %v37 = vld.sshfl [vmem:[#allocation1 + $0x18] sm:$0xff pattern:$0x75316420]
    %s38 = scalar_lea.vmem [#allocation1], 32
    %39 = vst [vmem:[%s38] ss:$2 sm:$0xff] %v17
    %v40 = vld.sshfl [vmem:[#allocation1 + $0x20] sm:$0xff pattern:$0x75316420]
    %v41 = vld.sshfl [vmem:[#allocation1 + $0x28] sm:$0xff pattern:$0x75316420]
    %s42 = scalar_lea.vmem [#allocation1], 48
    %43 = vst [vmem:[%s42] ss:$2 sm:$0xff] %v18
    %v44 = vld.sshfl [vmem:[#allocation1 + $0x30] sm:$0xff pattern:$0x75316420]
    %v45 = vld.sshfl [vmem:[#allocation1 + $0x38] sm:$0xff pattern:$0x75316420]
    %46 = vst [vmem:[#allocation1] ss:$2 sm:$0xff] %v19
    %v47 = vld.sshfl [vmem:[#allocation1] sm:$0xff pattern:$0x75316420]
    %v48 = vld.sshfl [vmem:[#allocation1 + $0x8] sm:$0xff pattern:$0x75316420]
    %49 = vst [vmem:[%s34] ss:$2 sm:$0xff] %v20
    %v50 = vld.sshfl [vmem:[#allocation1 + $0x10] sm:$0xff pattern:$0x75316420]
    %v51 = vld.sshfl [vmem:[#allocation1 + $0x18] sm:$0xff pattern:$0x75316420]
    %52 = vst [vmem:[%s38] ss:$2 sm:$0xff] %v21
    %v53 = vld.sshfl [vmem:[#allocation1 + $0x20] sm:$0xff pattern:$0x75316420]
    %v54 = vld.sshfl [vmem:[#allocation1 + $0x28] sm:$0xff pattern:$0x75316420]
    %55 = vst [vmem:[%s42] ss:$2 sm:$0xff] %v22
    %v56 = vld.sshfl [vmem:[#allocation1 + $0x30] sm:$0xff pattern:$0x75316420]
    %v57 = vld.sshfl [vmem:[#allocation1 + $0x38] sm:$0xff pattern:$0x75316420]
    %vm74 = vcmask 1042432
    %v75 = vsel %vm74, %v32, 0.0
    %v76 = vsel %vm74, %v33, 0.0
    %v77 = vadd.f32 %v75, %v76
    %78 = vadd.xlane.f32.xlu0 %v77
    %v79 = vpop.xlane.xlu0 %78
    %v80 = vsel %vm74, %v36, 0.0
    %v81 = vsel %vm74, %v37, 0.0
    %v82 = vadd.f32 %v80, %v81
    %83 = vadd.xlane.f32.xlu0 %v82
    %v84 = vpop.xlane.xlu0 %83
    %v85 = vsel %vm74, %v40, 0.0
    %v86 = vsel %vm74, %v41, 0.0
    %v87 = vadd.f32 %v85, %v86
    %88 = vadd.xlane.f32.xlu0 %v87
    %v89 = vpop.xlane.xlu0 %88
    %v90 = vsel %vm74, %v44, 0.0
    %v91 = vsel %vm74, %v45, 0.0
    %v92 = vadd.f32 %v90, %v91
    %93 = vadd.xlane.f32.xlu0 %v92
    %v94 = vpop.xlane.xlu0 %93
    %v95 = vsel %vm74, %v47, 0.0
    %v96 = vsel %vm74, %v48, 0.0
    %v97 = vadd.f32 %v95, %v96
    %98 = vadd.xlane.f32.xlu0 %v97
    %v99 = vpop.xlane.xlu0 %98
    %v100 = vsel %vm74, %v50, 0.0
    %v101 = vsel %vm74, %v51, 0.0
    %v102 = vadd.f32 %v100, %v101
    %103 = vadd.xlane.f32.xlu0 %v102
    %v104 = vpop.xlane.xlu0 %103
    %v105 = vsel %vm74, %v53, 0.0
    %v106 = vsel %vm74, %v54, 0.0
    %v107 = vadd.f32 %v105, %v106
    %108 = vadd.xlane.f32.xlu0 %v107
    %v109 = vpop.xlane.xlu0 %108
    %v110 = vsel %vm74, %v56, 0.0
    %v111 = vsel %vm74, %v57, 0.0
    %v112 = vadd.f32 %v110, %v111
    %113 = vadd.xlane.f32.xlu0 %v112
    %v114 = vpop.xlane.xlu0 %113
    %v115 = vrcp.pop 256.0
    %v116 = vmul.f32 256.0, %v115
    %v117 = vsub.f32 1.0, %v116
    %v118 = vmul.f32 %v115, %v117
    %v119 = vadd.f32 %v115, %v118
    %vm120 = vweird.f32 %v115
    %v121 = vsel %vm120, %v115, %v119
    %v122 = vmul.f32 %v79, %v121
    %v123 = vmul.f32 %v84, %v121
    %v124 = vmul.f32 %v89, %v121
    %v125 = vmul.f32 %v94, %v121
    %v126 = vmul.f32 %v99, %v121
    %v127 = vmul.f32 %v104, %v121
    %v128 = vmul.f32 %v109, %v121
    %v129 = vmul.f32 %v114, %v121
    %v130 = vld [vmem:[%s1] sm:$0x7]
    %v131 = vld [vmem:[%s2] sm:$0x1]
    %v133 = vperm.slane %v131, 0
    %v143 = vlaneseq
    %v144 = vand.u32 %v143, 127
    %v145 = vperm.slane %v122, %v144
    %v146 = vperm.slane %v123, %v144
    %v147 = vperm.slane %v124, %v144
    %v148 = vperm.slane %v125, %v144
    %v149 = vperm.slane %v126, %v144
    %v150 = vperm.slane %v127, %v144
    %v151 = vperm.slane %v128, %v144
    %v152 = vperm.slane %v129, %v144
    %vm153 = vcmask 1041409
    %v154 = vsel %vm153, %v146, %v145
    %vm155 = vcmask 1042434
    %v156 = vsel %vm155, %v147, %v154
    %vm157 = vcmask 1043459
    %v158 = vsel %vm157, %v148, %v156
    %vm159 = vcmask 1044484
    %v160 = vsel %vm159, %v149, %v158
    %vm161 = vcmask 1045509
    %v162 = vsel %vm161, %v150, %v160
    %vm163 = vcmask 1046534
    %v164 = vsel %vm163, %v151, %v162
    %vm165 = vcmask 1047559
    %v166 = vsel %vm165, %v152, %v164
    %vm167 = vcmask 23552
    %v168 = vsel %vm167, %v166, 0
    %v171 = vsel %vm74, %v130, 0
    %173 = vmatpush.msra.mxu0 0.0
    %174 = vmatpush.msra.mxu0 0.0
    %175 = vmatpush.msra.mxu0 0.0
    %176 = vmatpush.msra.mxu0 0.0
    %177 = vmatpush.msra.mxu0 0.0
    %178 = vmatpush.msra.mxu0 0.0
    %179 = vmatpush.msra.mxu0 0.0
    %180 = vmatpush.msra.mxu0 0.0
    %181 = vmatpush.msra.mxu0 0.0
    %182 = vmatpush.msra.mxu0 0.0
    %183 = vmatpush.msra.mxu0 0.0
    %184 = vmatpush.msra.mxu0 0.0
    %185 = vmatpush.msra.mxu0 0.0
    %186 = vmatpush.msra.mxu0 0.0
    %187 = vmatpush.msra.mxu0 0.0
    %188 = vmatpush.msra.mxu0 %v171
    %189 = vmatmul.f32.gmra.mxu0 %v168
    %v190 = vpop.f32.mrf.mxu0
    %v191 = vadd.f32 %v133, %v190
    %192 = vdwg.mxu0
    %193 = vst [vmem:[#allocation2] sm:$0xff] %v191
    // Predicated region
    $region14: #{tpu_custom_call.1} parent=1 // pred_check
      _
    $region15: #{tpu_custom_call.1} parent=1 // pred_check_branch
      %195 = sbr.rel (0) target = $region17
    $region16: #{tpu_custom_call.1} parent=1 // pred_region
      %197 = vsyncadd [#allocation3], 0
      %s199 = sshll.u32 [#allocation2], 4
      %s200 = int_to_ptr.vmem [resolvable:$true] %s199
      %s201 = sshll.u32 %s3, 4
      %s202 = int_to_ptr.hbm [resolvable:$true] %s201
      %204 = dma.vmem_to_hbm [thread:$0]  %s200, 128, %s202, [#allocation3]
    $region17: #{tpu_custom_call.1} parent=1 // pred_fallthru
      _
    // Predicated region
    $region18: #{tpu_custom_call.1} parent=1 // pred_check
      _
    $region19: #{tpu_custom_call.1} parent=1 // pred_check_branch
      %206 = sbr.rel (0) target = $region21
    $region20: #{tpu_custom_call.1} parent=1 // pred_region
      %208 = dma.done [#allocation3], 128
    $region21: #{tpu_custom_call.1} parent=1 // pred_fallthru
      _
    %209 = vsyncpa [#allocation3], 1

</llo_original>
